<compile_context>
chip_gen: v7x
topology: tpu7x:2x2x1
jax: 0.10.0
libtpu: 0.0.40
codegen_flags: <defaults>
</compile_context>

<pallas_src>
import jax
import jax.numpy as jnp
from jax.experimental import pallas as pl
from jax.experimental.pallas import tpu as pltpu


def perceptron_kernel(x_ref, w_ref, b_ref, o_ref):
    """x_ref: (TB, D) activations (native dtype), w_ref: (D, 1),
    b_ref: (1,) f32 scalar in SMEM, o_ref: (TB, 1)."""
    # MXU matmul with f32 accumulation (inputs may be bf16 or f32).
    z = jnp.dot(x_ref[...], w_ref[...], preferred_element_type=jnp.float32)
    z = z + b_ref[0]                      # scalar bias from SMEM
    # sigmoid: exp -> EUP, approx reciprocal -> EUP (free slot, avoids the
    # VPU Newton-iteration divide).
    e = jnp.exp(-z)
    o_ref[...] = pl.reciprocal(1.0 + e, approx=True).astype(o_ref.dtype)


def _pick_batch_tile(B, D, itemsize):
    """Full batch for small B; otherwise a multiple-of-8 row count sized so
    2 (double-buffer) * TB * D * itemsize stays around 8 MiB — comfortably
    under the 16 MiB (v5e) / 32 MiB (v6e, v7x) scoped-VMEM defaults and
    v7x's 64 MiB physical VMEM."""
    if B <= 1024:
        return B                          # full-extent block is always layout-legal
    budget_bytes = 4 * 1024 * 1024        # per live x tile (x2 for double buffering)
    tb = budget_bytes // max(1, D * itemsize)
    tb = (tb // 8) * 8                    # keep the (8, ...) sublane rule
    return max(8, min(1024, tb))


def perceptron_forward(x, weight, bias):
    """x: (B, D); weight: (1, D) (PyTorch nn.Linear layout); bias: (1,).
    Returns sigmoid(x @ weight.T + bias), shape (B, 1), in x.dtype."""
    B, D = x.shape
    # Keep activations in their native dtype (no wrapper upcast); the tiny
    # weight is cast to match so the MXU sees a single input dtype.
    w_t = weight.reshape(1, D).T.astype(x.dtype)         # (D, 1)
    b = bias.reshape(1).astype(jnp.float32)              # scalar bias -> SMEM

    TB = _pick_batch_tile(B, D, jnp.dtype(x.dtype).itemsize)
    grid = (pl.cdiv(B, TB),)

    # NOTE: the (TB, 1) output is lane-sparse; with TB capped at 1024 the
    # masked store stays hidden under the streaming x DMA (kernel is
    # HBM-bandwidth bound at ~0.5 flop/byte).
    # TODO(synk): for very large D, add a trailing "arbitrary" K grid axis with
    # an f32 (TB, 1) accumulator in scratch_shapes to bound the x block.
    return pl.pallas_call(
        perceptron_kernel,
        out_shape=jax.ShapeDtypeStruct((B, 1), x.dtype),
        grid_spec=pltpu.PrefetchScalarGridSpec(
            num_scalar_prefetch=0,
            grid=grid,
            in_specs=[
                # Stream x over the batch axis (auto double-buffered).
                pl.BlockSpec((TB, D), lambda i: (i, 0)),
                # Weight stays resident across the whole grid.
                pl.BlockSpec((D, 1), lambda i: (0, 0)),
                # Bias as a scalar in SMEM.
                pl.BlockSpec(memory_space=pltpu.MemorySpace.SMEM),
            ],
            out_specs=pl.BlockSpec((TB, 1), lambda i: (i, 0)),
        ),
        # Independent batch tiles -> "parallel" lets v7x's two TensorCores
        # split the grid; harmless no-op on single-TC v5e/v6e.
        compiler_params=pltpu.CompilerParams(
            dimension_semantics=("parallel",),
        ),
    )(x, w_t, b)


if __name__ == "__main__":
    key = jax.random.PRNGKey(0)
    kx, kw, kb = jax.random.split(key, 3)

    batch = 8
    input_size = 32

    x = jax.random.normal(kx, (batch, input_size), dtype=jnp.float32)
    # Deterministic parameter init (mimics nn.Linear's uniform(-1/sqrt(D), 1/sqrt(D)))
    bound = 1.0 / jnp.sqrt(jnp.float32(input_size))
    weight = jax.random.uniform(kw, (1, input_size), minval=-bound, maxval=bound,
                                dtype=jnp.float32)
    bias = jax.random.uniform(kb, (1,), minval=-bound, maxval=bound,
                              dtype=jnp.float32)

    out = jax.block_until_ready(perceptron_forward(x, weight, bias))

    # Reference check in plain JAX.
    ref = jax.nn.sigmoid(x @ weight.T + bias)
    assert out.shape == (batch, 1)
    # approx reciprocal (EUP vrcp) carries ~1e-4 relative error -> loosened tol.
    assert jnp.allclose(out, ref, atol=2e-3, rtol=2e-3)

    print("KERNEL_OK")
</pallas_src>

<mosaic_0001>
module attributes {stable_mosaic.version = 11 : i64} {
  func.func @perceptron_kernel(%arg0: i32, %arg1: memref<8x32xf32, #tpu.memory_space<vmem>>, %arg2: memref<32x1xf32, #tpu.memory_space<vmem>>, %arg3: memref<1xf32, #tpu.memory_space<smem>>, %arg4: memref<8x1xf32, #tpu.memory_space<vmem>>) attributes {dimension_semantics = [#tpu.dimension_semantics<parallel>], iteration_bounds = array<i64: 1>, scalar_prefetch = 0 : i64, scratch_operands = 0 : i64, tpu.core_type = #tpu.core_type<tc>, window_params = [{transform_indices = @transform_0, window_bounds = array<i64: 8, 32>}, {pipeline_mode = #tpu.pipeline_mode<synchronous>, transform_indices = @transform_1, window_bounds = array<i64: 32, 1>}, {transform_indices = @transform_2, window_bounds = array<i64: 1>}, {transform_indices = @transform_3, window_bounds = array<i64: 8, 1>}]} {
    %c0 = arith.constant 0 : index
    %c0_0 = arith.constant 0 : index
    %0 = vector.load %arg1[%c0, %c0_0] : memref<8x32xf32, #tpu.memory_space<vmem>>, vector<8x32xf32>
    %c0_1 = arith.constant 0 : index
    %c0_2 = arith.constant 0 : index
    %1 = vector.load %arg2[%c0_1, %c0_2] : memref<32x1xf32, #tpu.memory_space<vmem>>, vector<32x1xf32>
    %cst = arith.constant dense<0.000000e+00> : vector<8x1xf32>
    %2 = tpu.matmul %0, %1, %cst {dimension_numbers = #tpu.dot_dimension_numbers<[1], [0], [0], [1], [0, 0, 1, 1], [], []>} : vector<8x32xf32>, vector<32x1xf32>, vector<8x1xf32> -> vector<8x1xf32>
    %c0_3 = arith.constant 0 : index
    %3 = memref.load %arg3[%c0_3] : memref<1xf32, #tpu.memory_space<smem>>
    %4 = vector.broadcast %3 : f32 to vector<8x1xf32>
    %5 = arith.addf %2, %4 : vector<8x1xf32>
    %cst_4 = arith.constant 0.000000e+00 : f32
    %6 = vector.broadcast %cst_4 : f32 to vector<8x1xf32>
    %7 = arith.subf %6, %5 : vector<8x1xf32>
    %8 = math.exp %7 : vector<8x1xf32>
    %cst_5 = arith.constant 1.000000e+00 : f32
    %9 = vector.broadcast %cst_5 : f32 to vector<8x1xf32>
    %10 = arith.addf %9, %8 : vector<8x1xf32>
    %11 = tpu.reciprocal %10 {approx = true} : vector<8x1xf32> -> vector<8x1xf32>
    %c0_6 = arith.constant 0 : index
    %c0_7 = arith.constant 0 : index
    %12 = vector.load %arg4[%c0_6, %c0_7] : memref<8x1xf32, #tpu.memory_space<vmem>>, vector<8x1xf32>
    tpu.vector_store %arg4[%c0_6, %c0_7], %11 {strides = array<i32>} : memref<8x1xf32, #tpu.memory_space<vmem>>, vector<8x1xf32>,
    return
  }
  func.func @transform_0(%arg0: i32) -> (i32, i32) {
    %c0_i32 = arith.constant 0 : i32
    %c0_i32_0 = arith.constant 0 : i32
    return %arg0, %c0_i32 : i32, i32
  }
  func.func @transform_1(%arg0: i32) -> (i32, i32) {
    %c0_i32 = arith.constant 0 : i32
    %c0_i32_0 = arith.constant 0 : i32
    %c0_i32_1 = arith.constant 0 : i32
    return %c0_i32, %c0_i32_0 : i32, i32
  }
  func.func @transform_2(%arg0: i32) -> i32 {
    %c0_i32 = arith.constant 0 : i32
    %c0_i32_0 = arith.constant 0 : i32
    return %c0_i32 : i32
  }
  func.func @transform_3(%arg0: i32) -> (i32, i32) {
    %c0_i32 = arith.constant 0 : i32
    %c0_i32_0 = arith.constant 0 : i32
    return %arg0, %c0_i32 : i32, i32
  }
}

</mosaic_0001>

<llo_original>
// kernel: tpu_custom_call.1
$region0: #{tpu_custom_call.1}
  #allocation0 [shape = 'u32[]', space=smem, size = 0x4, offset = 0x4, fixed_abs, tag = 'smem constant byte address 0x4 - core index']
  #allocation1 [shape = 'u32[144,128]{1,0:T(1,128)}', space=vmem, size = 0x12000, scoped, tag = 'internal scratch']
  #allocation2 [shape = 'f32[1]{0:T(128)S(6)}', space=smem, size = 0x200, scoped, tag = 'scoped memory for tpu_custom_call.1']
  %s0 = inlined_call_operand.vmem [shape: f32[8,32], index: 0, kind: input, shape index: {}]
  %s1 = inlined_call_operand.vmem [shape: f32[32,1], index: 1, kind: input, shape index: {}]
  %s2 = inlined_call_operand.<no memory space> [shape: f32[1], index: 2, kind: input, shape index: {}]
  %s3 = inlined_call_operand.vmem [shape: f32[8,1], index: 3, kind: output, shape index: {}]
  %s4 = sld [smem:[#allocation0]]
  $region22: #{tpu_custom_call.1} parent=0
    _
  %s6 = ssub.s32 1, %s4
  %s7 = scalar_select 0, %s6, %s4
  %8 = sst [smem:[#allocation2]] %s2
  // Predicated region
  $region2: #{tpu_custom_call.1} parent=0 // pred_check
    _
  $region3: #{tpu_custom_call.1} parent=0 // pred_check_branch
    %10 = sbr.rel (0) target = $region5
  $region4: #{tpu_custom_call.1} parent=0 // pred_region
    _
  $region5: #{tpu_custom_call.1} parent=0 // pred_fallthru
    _
  // Predicated region
  $region6: #{tpu_custom_call.1} parent=0 // pred_check
    _
  $region7: #{tpu_custom_call.1} parent=0 // pred_check_branch
    %12 = sbr.rel (0) target = $region9
  $region8: #{tpu_custom_call.1} parent=0 // pred_region
    _
  $region9: #{tpu_custom_call.1} parent=0 // pred_fallthru
    _
  // Predicated region
  $region10: #{tpu_custom_call.1} parent=0 // pred_check
    _
  $region11: #{tpu_custom_call.1} parent=0 // pred_check_branch
    %14 = sbr.rel (0) target = $region13
  $region12: #{tpu_custom_call.1} parent=0 // pred_region
    _
  $region13: #{tpu_custom_call.1} parent=0 // pred_fallthru
    _
  %v15 = vld [vmem:[%s0] sm:$0xff]
  %v16 = vld [vmem:[%s1] sm:$0xff]
  %v17 = vld [vmem:[%s1 + $0x8] sm:$0xff]
  %v18 = vld [vmem:[%s1 + $0x10] sm:$0xff]
  %v19 = vld [vmem:[%s1 + $0x18] sm:$0xff]
  %s20 = sld [smem:[#allocation2]]
  %v21 = vstv %s20
  %vm22 = vcmask 261120
  %v24 = vsel %vm22, %v15, 0
  %26 = vmatprep.subr.mxu0 0.0
  %27 = vmatpush1.msra.mxu0 %v16
  %28 = vmatprep.subr.mxu0 0.0
  %29 = vmatpush1.msra.mxu0 %v17
  %30 = vmatprep.subr.mxu0 0.0
  %31 = vmatpush1.msra.mxu0 %v18
  %32 = vmatprep.subr.mxu0 0.0
  %33 = vmatpush1.msra.mxu0 %v19
  %34 = vmatprep.subr.mxu0 0.0
  %35 = vmatpush1.msra.mxu0 0.0
  %36 = vmatprep.subr.mxu0 0.0
  %37 = vmatpush1.msra.mxu0 0.0
  %38 = vmatprep.subr.mxu0 0.0
  %39 = vmatpush1.msra.mxu0 0.0
  %40 = vmatprep.subr.mxu0 0.0
  %41 = vmatpush1.msra.mxu0 0.0
  %42 = vmatprep.subr.mxu0 0.0
  %43 = vmatpush1.msra.mxu0 0.0
  %44 = vmatprep.subr.mxu0 0.0
  %45 = vmatpush1.msra.mxu0 0.0
  %46 = vmatprep.subr.mxu0 0.0
  %47 = vmatpush1.msra.mxu0 0.0
  %48 = vmatprep.subr.mxu0 0.0
  %49 = vmatpush1.msra.mxu0 0.0
  %50 = vmatprep.subr.mxu0 0.0
  %51 = vmatpush1.msra.mxu0 0.0
  %52 = vmatprep.subr.mxu0 0.0
  %53 = vmatpush1.msra.mxu0 0.0
  %54 = vmatprep.subr.mxu0 0.0
  %55 = vmatpush1.msra.mxu0 0.0
  %56 = vmatprep.subr.mxu0 0.0
  %57 = vmatpush1.msra.mxu0 0.0
  %58 = vmatprep.subr.mxu0 0.0
  %59 = vmatpush1.msra.mxu0 0.0
  %60 = vmatprep.subr.mxu0 0.0
  %61 = vmatpush1.msra.mxu0 0.0
  %62 = vmatprep.subr.mxu0 0.0
  %63 = vmatpush1.msra.mxu0 0.0
  %64 = vmatprep.subr.mxu0 0.0
  %65 = vmatpush1.msra.mxu0 0.0
  %66 = vmatprep.subr.mxu0 0.0
  %67 = vmatpush1.msra.mxu0 0.0
  %68 = vmatprep.subr.mxu0 0.0
  %69 = vmatpush1.msra.mxu0 0.0
  %70 = vmatprep.subr.mxu0 0.0
  %71 = vmatpush1.msra.mxu0 0.0
  %72 = vmatprep.subr.mxu0 0.0
  %73 = vmatpush1.msra.mxu0 0.0
  %74 = vmatprep.subr.mxu0 0.0
  %75 = vmatpush1.msra.mxu0 0.0
  %76 = vmatprep.subr.mxu0 0.0
  %77 = vmatpush1.msra.mxu0 0.0
  %78 = vmatprep.subr.mxu0 0.0
  %79 = vmatpush1.msra.mxu0 0.0
  %80 = vmatprep.subr.mxu0 0.0
  %81 = vmatpush1.msra.mxu0 0.0
  %82 = vmatprep.subr.mxu0 0.0
  %83 = vmatpush1.msra.mxu0 0.0
  %84 = vmatprep.subr.mxu0 0.0
  %85 = vmatpush1.msra.mxu0 0.0
  %86 = vmatprep.subr.mxu0 0.0
  %87 = vmatpush1.msra.mxu0 0.0
  %88 = vmatprep.subr.mxu0 0.0
  %89 = vmatpush1.msra.mxu0 0.0
  %90 = vmatprep.mubr.f32.mxu0 0.0
  %91 = vmatmul.mubr.f32.gmra.mrb[0].mxu0 %v24
  %v92 = vpop.f32.mrb[0].mxu0
  %v93 = vadd.f32 %v21, %v92
  %v94 = vpop.f32.mrb[0].mxu0
  %95 = vdwg.mxu0
  %v96 = vsub.f32 0.0, %v93
  %v97 = vmul.f32 %v96, 1.442695
  %v98 = vpow.pop %v97
  %v99 = vadd.f32 %v98, 1.0
  %v100 = vrcp.pop %v99
  %vm101 = vcmask 7168
  %102 = vst.msk [vmem:[%s3] sm:$0xff] %vm101, %v100
  // Predicated region
  $region14: #{tpu_custom_call.1} parent=0 // pred_check
    _
  $region15: #{tpu_custom_call.1} parent=0 // pred_check_branch
    %104 = sbr.rel (0) target = $region17
  $region16: #{tpu_custom_call.1} parent=0 // pred_region
    _
  $region17: #{tpu_custom_call.1} parent=0 // pred_fallthru
    _
  // Predicated region
  $region18: #{tpu_custom_call.1} parent=0 // pred_check
    _
  $region19: #{tpu_custom_call.1} parent=0 // pred_check_branch
    %106 = sbr.rel (0) target = $region21
  $region20: #{tpu_custom_call.1} parent=0 // pred_region
    _
  $region21: #{tpu_custom_call.1} parent=0 // pred_fallthru
    _

</llo_original>
